<compile_context>
chip_gen: v7x
topology: tpu7x:2x2x1
jax: 0.10.0
libtpu: 0.0.40
codegen_flags: <defaults>
</compile_context>

<pallas_src>
import functools

import jax
import jax.numpy as jnp
from jax.experimental import pallas as pl
from jax.experimental.pallas import tpu as pltpu

_LANE = 128  # TPU lane width; output columns are padded to a multiple of this.


def _siamese_mlp_kernel(x1_ref, x2_ref, w1_ref, b1_ref, w2_ref, b2_ref,
                        o1_ref, o2_ref):
    B = o1_ref.shape[0]

    # Fold both branches into one batched matmul (M = 2*B) on the shared
    # weights.  Inputs arrive as f32; the bf16 cast happens here on the VPU
    # (no standalone XLA convert op / extra HBM round-trip in the wrapper).
    x = jnp.concatenate([x1_ref[...], x2_ref[...]], axis=0).astype(jnp.bfloat16)

    # Layer 1: bf16 operands on the MXU with f32 accumulation; bias + ReLU in
    # f32 on the VPU (f32 elementwise is the cheap path on v5e as well).
    h = jnp.dot(x, w1_ref[...], preferred_element_type=jnp.float32) + b1_ref[...]
    h = jnp.maximum(h, 0.0)

    # Layer 2: bf16 MXU matmul into a lane-dense (E_pad = 128-wide) slab
    # + f32 bias.  w2/b2 were zero-padded once at init, so stores are
    # full-lane unmasked vst's.
    out = jnp.dot(h.astype(jnp.bfloat16), w2_ref[...],
                  preferred_element_type=jnp.float32) + b2_ref[...]

    # Two branch outputs written directly from the kernel (no wrapper split).
    o1_ref[...] = out[:B]
    o2_ref[...] = out[B:]


def prepare_params(params):
    """One-time weight preprocessing (hoisted out of the per-call jit).

    Casts matmul weights to bf16 and zero-pads the second layer's output
    columns to a lane multiple so kernel stores are lane-dense.
    Returns (prepared_params, emb_dim).
    """
    w1, b1, w2, b2 = params
    E = w2.shape[1]
    E_pad = max(_LANE, pl.cdiv(E, _LANE) * _LANE)

    w1_b = w1.astype(jnp.bfloat16)                                   # (D, H)
    b1_r = jnp.asarray(b1, jnp.float32).reshape(1, -1)               # (1, H)
    w2_b = jnp.pad(w2, ((0, 0), (0, E_pad - E))).astype(jnp.bfloat16)  # (H, E_pad)
    b2_p = jnp.pad(jnp.asarray(b2, jnp.float32).reshape(1, -1),
                   ((0, 0), (0, E_pad - E)))                          # (1, E_pad)
    return (w1_b, b1_r, w2_b, b2_p), E


@functools.partial(jax.jit, static_argnames=("emb_dim",))
def siamese_forward(input_1, input_2, prepared_params, *, emb_dim):
    """Shared-weight forward over two NCHW inputs. Returns (out_1, out_2)."""
    w1_b, b1, w2_b, b2_p = prepared_params
    B = input_1.shape[0]
    D = w1_b.shape[0]
    E_pad = w2_b.shape[1]

    # Flatten NCHW -> (B, D): a free (contiguous) reshape; dtype stays f32 —
    # the bf16 cast happens inside the kernel.
    x1 = input_1.reshape(B, D)
    x2 = input_2.reshape(B, D)

    vmem = pl.BlockSpec(memory_space=pltpu.MemorySpace.VMEM)
    o1, o2 = pl.pallas_call(
        _siamese_mlp_kernel,
        out_shape=(jax.ShapeDtypeStruct((B, E_pad), jnp.float32),
                   jax.ShapeDtypeStruct((B, E_pad), jnp.float32)),
        in_specs=[vmem] * 6,     # whole arrays resident in VMEM, single invocation
        out_specs=(vmem, vmem),
    )(x1, x2, w1_b, b1, w2_b, b2_p)

    # Drop the lane padding (the only remaining post-kernel op).
    return o1[:, :emb_dim], o2[:, :emb_dim]


def init_params(key, D, H, E):
    k1, k2, k3, k4 = jax.random.split(key, 4)
    w1 = jax.random.normal(k1, (D, H), jnp.float32) * (1.0 / jnp.sqrt(D))
    b1 = jax.random.normal(k2, (1, H), jnp.float32) * 0.01
    w2 = jax.random.normal(k3, (H, E), jnp.float32) * (1.0 / jnp.sqrt(H))
    b2 = jax.random.normal(k4, (1, E), jnp.float32) * 0.01
    return w1, b1, w2, b2


def _reference(input_1, input_2, params):
    # Plain-JAX reference of the shared backbone with the SAME mixed precision
    # as the kernel (bf16 matmul operands, f32 accumulate / bias / ReLU).
    w1, b1, w2, b2 = params
    B = input_1.shape[0]
    w1_b = w1.astype(jnp.bfloat16)
    w2_b = w2.astype(jnp.bfloat16)

    def f(x):
        x = x.reshape(B, -1).astype(jnp.bfloat16)
        h = jnp.dot(x, w1_b, preferred_element_type=jnp.float32) + b1
        h = jnp.maximum(h, 0.0)
        return jnp.dot(h.astype(jnp.bfloat16), w2_b,
                       preferred_element_type=jnp.float32) + b2

    return f(input_1), f(input_2)


if __name__ == "__main__":
    # Small shapes: batch=2, channels=4, spatial=16x16 -> D=1024, H=128, E=32.
    B, C, Hs, Ws = 2, 4, 16, 16
    D = C * Hs * Ws
    HID, EMB = 128, 32

    key = jax.random.PRNGKey(0)
    kx1, kx2, kp = jax.random.split(key, 3)
    input_1 = jax.random.normal(kx1, (B, C, Hs, Ws), jnp.float32)  # NCHW
    input_2 = jax.random.normal(kx2, (B, C, Hs, Ws), jnp.float32)  # NCHW
    params = init_params(kp, D, HID, EMB)

    # One-time preprocessing (bf16 cast + lane padding), outside the hot path.
    prepared, emb_dim = prepare_params(params)
    jax.block_until_ready(prepared)

    out_1, out_2 = siamese_forward(input_1, input_2, prepared, emb_dim=emb_dim)
    jax.block_until_ready((out_1, out_2))

    # Sanity check against a matching-precision plain-JAX reference.
    ref_1, ref_2 = _reference(input_1, input_2, params)
    assert out_1.shape == (B, EMB) and out_2.shape == (B, EMB)
    assert jnp.allclose(out_1, ref_1, atol=1e-3, rtol=1e-3)
    assert jnp.allclose(out_2, ref_2, atol=1e-3, rtol=1e-3)

    print("KERNEL_OK")
</pallas_src>

<mosaic_0001>
module attributes {stable_mosaic.version = 11 : i64} {
  func.func @_siamese_mlp_kernel(%arg0: memref<2x1024xf32, #tpu.memory_space<vmem>>, %arg1: memref<2x1024xf32, #tpu.memory_space<vmem>>, %arg2: memref<1024x128xbf16, #tpu.memory_space<vmem>>, %arg3: memref<1x128xf32, #tpu.memory_space<vmem>>, %arg4: memref<128x128xbf16, #tpu.memory_space<vmem>>, %arg5: memref<1x128xf32, #tpu.memory_space<vmem>>, %arg6: memref<2x128xf32, #tpu.memory_space<vmem>>, %arg7: memref<2x128xf32, #tpu.memory_space<vmem>>) attributes {dimension_semantics = [], scalar_prefetch = 0 : i64, scratch_operands = 0 : i64, tpu.core_type = #tpu.core_type<tc>} {
    %c0 = arith.constant 0 : index
    %c0_0 = arith.constant 0 : index
    %0 = vector.load %arg0[%c0, %c0_0] : memref<2x1024xf32, #tpu.memory_space<vmem>>, vector<2x1024xf32>
    %c0_1 = arith.constant 0 : index
    %c0_2 = arith.constant 0 : index
    %1 = vector.load %arg1[%c0_1, %c0_2] : memref<2x1024xf32, #tpu.memory_space<vmem>>, vector<2x1024xf32>
    %2 = tpu.concatenate %0, %1 in 0 : vector<2x1024xf32>, vector<2x1024xf32> -> vector<4x1024xf32>
    %3 = arith.truncf %2 : vector<4x1024xf32> to vector<4x1024xbf16>
    %c0_3 = arith.constant 0 : index
    %c0_4 = arith.constant 0 : index
    %4 = vector.load %arg2[%c0_3, %c0_4] : memref<1024x128xbf16, #tpu.memory_space<vmem>>, vector<1024x128xbf16>
    %cst = arith.constant dense<0.000000e+00> : vector<4x128xf32>
    %5 = tpu.matmul %3, %4, %cst {dimension_numbers = #tpu.dot_dimension_numbers<[1], [0], [0], [1], [0, 0, 1, 1], [], []>} : vector<4x1024xbf16>, vector<1024x128xbf16>, vector<4x128xf32> -> vector<4x128xf32>
    %c0_5 = arith.constant 0 : index
    %c0_6 = arith.constant 0 : index
    %6 = vector.load %arg3[%c0_5, %c0_6] : memref<1x128xf32, #tpu.memory_space<vmem>>, vector<1x128xf32>
    %7 = vector.broadcast %6 : vector<1x128xf32> to vector<4x128xf32>
    %8 = arith.addf %5, %7 : vector<4x128xf32>
    %cst_7 = arith.constant 0.000000e+00 : f32
    %9 = vector.broadcast %cst_7 : f32 to vector<4x128xf32>
    %10 = arith.maximumf %8, %9 : vector<4x128xf32>
    %11 = arith.truncf %10 : vector<4x128xf32> to vector<4x128xbf16>
    %c0_8 = arith.constant 0 : index
    %c0_9 = arith.constant 0 : index
    %12 = vector.load %arg4[%c0_8, %c0_9] : memref<128x128xbf16, #tpu.memory_space<vmem>>, vector<128x128xbf16>
    %cst_10 = arith.constant dense<0.000000e+00> : vector<4x128xf32>
    %13 = tpu.matmul %11, %12, %cst_10 {dimension_numbers = #tpu.dot_dimension_numbers<[1], [0], [0], [1], [0, 0, 1, 1], [], []>} : vector<4x128xbf16>, vector<128x128xbf16>, vector<4x128xf32> -> vector<4x128xf32>
    %c0_11 = arith.constant 0 : index
    %c0_12 = arith.constant 0 : index
    %14 = vector.load %arg5[%c0_11, %c0_12] : memref<1x128xf32, #tpu.memory_space<vmem>>, vector<1x128xf32>
    %15 = vector.broadcast %14 : vector<1x128xf32> to vector<4x128xf32>
    %16 = arith.addf %13, %15 : vector<4x128xf32>
    %17 = vector.extract_strided_slice %16 {offsets = [0, 0], sizes = [2, 128], strides = [1, 1]} : vector<4x128xf32> to vector<2x128xf32>
    %c0_13 = arith.constant 0 : index
    %c0_14 = arith.constant 0 : index
    %18 = vector.load %arg6[%c0_13, %c0_14] : memref<2x128xf32, #tpu.memory_space<vmem>>, vector<2x128xf32>
    tpu.vector_store %arg6[%c0_13, %c0_14], %17 {strides = array<i32>} : memref<2x128xf32, #tpu.memory_space<vmem>>, vector<2x128xf32>,
    %19 = vector.extract_strided_slice %16 {offsets = [2, 0], sizes = [2, 128], strides = [1, 1]} : vector<4x128xf32> to vector<2x128xf32>
    %c0_15 = arith.constant 0 : index
    %c0_16 = arith.constant 0 : index
    %20 = vector.load %arg7[%c0_15, %c0_16] : memref<2x128xf32, #tpu.memory_space<vmem>>, vector<2x128xf32>
    tpu.vector_store %arg7[%c0_15, %c0_16], %19 {strides = array<i32>} : memref<2x128xf32, #tpu.memory_space<vmem>>, vector<2x128xf32>,
    return
  }
}

</mosaic_0001>

<llo_original>
// kernel: siamese_forward.1
$region0: #{siamese_forward.1}
  #allocation0 [shape = 'u32[]', space=smem, size = 0x4, offset = 0x4, fixed_abs, tag = 'smem constant byte address 0x4 - core index']
  #allocation1 [shape = 'u32[144,128]{1,0:T(1,128)}', space=vmem, size = 0x12000, scoped, tag = 'internal scratch']
  %s0 = inlined_call_operand.vmem [shape: f32[2,1024], index: 0, kind: input, shape index: {}]
  %s1 = inlined_call_operand.vmem [shape: f32[2,1024], index: 1, kind: input, shape index: {}]
  %s2 = inlined_call_operand.hbm [shape: bf16[1024,128], index: 2, kind: input, shape index: {}]
  %s3 = inlined_call_operand.vmem [shape: f32[1,128], index: 3, kind: input, shape index: {}]
  %s4 = inlined_call_operand.vmem [shape: bf16[128,128], index: 4, kind: input, shape index: {}]
  %s5 = inlined_call_operand.vmem [shape: f32[1,128], index: 5, kind: input, shape index: {}]
  %s6 = inlined_call_operand.hbm [shape: f32[2,128], index: 6, kind: output, shape index: {0}]
  %s7 = inlined_call_operand.hbm [shape: f32[2,128], index: 7, kind: output, shape index: {1}]
  %8 = xla_tuple %s6, %s7
  %s9 = sld [smem:[#allocation0]]
  $region46: #{siamese_forward.1} parent=0
    _
  %s11 = ssub.s32 1, %s9
  %s12 = scalar_select 0, %s11, %s9
  $region1: #{siamese_forward.1} parent=0
    #allocation2 [shape = 'u8[262144]{0}', space=vmem, size = 0x40000, scoped, tag = 'input window, operand 2, single buffered']
    #allocation3 [shape = 's32[1]{0}', space=sflag, size = 0x4, scoped, tag = 'scoped memory for siamese_forward.1']
    #allocation4 [shape = 's32[1]{0}', space=sflag, size = 0x4, scoped, tag = 'scoped memory for siamese_forward.1']
    #allocation5 [shape = 'u8[1024]{0}', space=vmem, size = 0x400, scoped, tag = 'output window, operand 0, single buffered']
    #allocation6 [shape = 'u8[1024]{0}', space=vmem, size = 0x400, scoped, tag = 'output window, operand 1, single buffered']
    #allocation7 [shape = 's32[1]{0}', space=sflag, size = 0x4, scoped, tag = 'scoped memory for siamese_forward.1']
    %13 = vsyncpa [#allocation3], 0
    %14 = vsyncpa [#allocation4], 0
    %15 = vsyncpa [#allocation7], 0
    // Predicated region
    $region2: #{siamese_forward.1} parent=1 // pred_check
      _
    $region3: #{siamese_forward.1} parent=1 // pred_check_branch
      %17 = sbr.rel (0) target = $region5
    $region4: #{siamese_forward.1} parent=1 // pred_region
      _
    $region5: #{siamese_forward.1} parent=1 // pred_fallthru
      _
    // Predicated region
    $region6: #{siamese_forward.1} parent=1 // pred_check
      _
    $region7: #{siamese_forward.1} parent=1 // pred_check_branch
      %19 = sbr.rel (0) target = $region9
    $region8: #{siamese_forward.1} parent=1 // pred_region
      _
    $region9: #{siamese_forward.1} parent=1 // pred_fallthru
      _
    // Predicated region
    $region10: #{siamese_forward.1} parent=1 // pred_check
      _
    $region11: #{siamese_forward.1} parent=1 // pred_check_branch
      %21 = sbr.rel (0) target = $region13
    $region12: #{siamese_forward.1} parent=1 // pred_region
      %s23 = ssub.s32 8192, 8192
      %24 = vsyncadd [#allocation3], %s23
      %s25 = sshll.u32 [#allocation2], 4
      %s26 = int_to_ptr.vmem [resolvable:$true] %s25
      %31 = dma.hbm_to_vmem [thread:$0]  %s2, 8192, %s26, [#allocation3], 64, 64, 4
    $region13: #{siamese_forward.1} parent=1 // pred_fallthru
      _
    // Predicated region
    $region14: #{siamese_forward.1} parent=1 // pred_check
      _
    $region15: #{siamese_forward.1} parent=1 // pred_check_branch
      %33 = sbr.rel (0) target = $region17
    $region16: #{siamese_forward.1} parent=1 // pred_region
      _
    $region17: #{siamese_forward.1} parent=1 // pred_fallthru
      _
    // Predicated region
    $region18: #{siamese_forward.1} parent=1 // pred_check
      _
    $region19: #{siamese_forward.1} parent=1 // pred_check_branch
      %35 = sbr.rel (0) target = $region21
    $region20: #{siamese_forward.1} parent=1 // pred_region
      _
    $region21: #{siamese_forward.1} parent=1 // pred_fallthru
      _
    // Predicated region
    $region22: #{siamese_forward.1} parent=1 // pred_check
      _
    $region23: #{siamese_forward.1} parent=1 // pred_check_branch
      %37 = sbr.rel (0) target = $region25
    $region24: #{siamese_forward.1} parent=1 // pred_region
      _
    $region25: #{siamese_forward.1} parent=1 // pred_fallthru
      _
    // Predicated region
    $region26: #{siamese_forward.1} parent=1 // pred_check
      _
    $region27: #{siamese_forward.1} parent=1 // pred_check_branch
      %39 = sbr.rel (0) target = $region29
    $region28: #{siamese_forward.1} parent=1 // pred_region
      %40 = dma.done [#allocation3], 8192
    $region29: #{siamese_forward.1} parent=1 // pred_fallthru
      _
    %v42 = vld [vmem:[%s0] sm:$0xff]
    %v43 = vld [vmem:[%s0 + $0x8] sm:$0xff]
    %v44 = vld [vmem:[%s1] sm:$0xff]
    %v45 = vld [vmem:[%s1 + $0x8] sm:$0xff]
    %v48 = vcombine.high %v42, %v42
    %v50 = vunpack.c.l.s4 1983009808
    %v51 = vunpack.c.0.s8 %v50
    %v52 = vlaneseq
    %v53 = vshrl.u32 %v52, 7
    %v54 = vsub.s32 %v51, %v53
    %v55 = vrot.slane %v42, %v54
    %v57 = vunpack.c.l.s4 1983009808
    %v58 = vunpack.c.0.s8 %v57
    %v59 = vlaneseq
    %v60 = vshrl.u32 %v59, 7
    %v61 = vsub.s32 %v58, %v60
    %v62 = vrot.slane %v48, %v61
    %v63 = vcombine.high %v55, %v55
    %v64 = vcombine.high %v62, %v62
    %v65 = vcombine.high %v43, %v43
    %v67 = vunpack.c.l.s4 1983009808
    %v68 = vunpack.c.0.s8 %v67
    %v69 = vlaneseq
    %v70 = vshrl.u32 %v69, 7
    %v71 = vsub.s32 %v68, %v70
    %v72 = vrot.slane %v43, %v71
    %v74 = vunpack.c.l.s4 1983009808
    %v75 = vunpack.c.0.s8 %v74
    %v76 = vlaneseq
    %v77 = vshrl.u32 %v76, 7
    %v78 = vsub.s32 %v75, %v77
    %v79 = vrot.slane %v65, %v78
    %v80 = vcombine.high %v72, %v72
    %v81 = vcombine.high %v79, %v79
    %v92 = vcombine.low %v44, %v44
    %v94 = vunpack.c.l.s4 1983009808
    %v95 = vunpack.c.0.s8 %v94
    %v96 = vlaneseq
    %v97 = vshrl.u32 %v96, 7
    %v98 = vsub.s32 %v95, %v97
    %v99 = vrot.slane %v92, %v98
    %v101 = vunpack.c.l.s4 1983009808
    %v102 = vunpack.c.0.s8 %v101
    %v103 = vlaneseq
    %v104 = vshrl.u32 %v103, 7
    %v105 = vsub.s32 %v102, %v104
    %v106 = vrot.slane %v44, %v105
    %v107 = vcombine.high %v99, %v99
    %v108 = vcombine.high %v106, %v106
    %v109 = vcombine.low %v45, %v45
    %v111 = vunpack.c.l.s4 1983009808
    %v112 = vunpack.c.0.s8 %v111
    %v113 = vlaneseq
    %v114 = vshrl.u32 %v113, 7
    %v115 = vsub.s32 %v112, %v114
    %v116 = vrot.slane %v109, %v115
    %v118 = vunpack.c.l.s4 1983009808
    %v119 = vunpack.c.0.s8 %v118
    %v120 = vlaneseq
    %v121 = vshrl.u32 %v120, 7
    %v122 = vsub.s32 %v119, %v121
    %v123 = vrot.slane %v45, %v122
    %v124 = vcombine.high %v116, %v116
    %v125 = vcombine.high %v123, %v123
    %vm134 = vcmask 1041408
    %v135 = vsel %vm134, %v55, %v99
    %v136 = vsel %vm134, %v63, %v107
    %v137 = vsel %vm134, %v62, %v106
    %v138 = vsel %vm134, %v64, %v108
    %v139 = vsel %vm134, %v72, %v116
    %v140 = vsel %vm134, %v80, %v124
    %v141 = vsel %vm134, %v79, %v123
    %v142 = vsel %vm134, %v81, %v125
    %v143 = vpack.c.bf16 %v135, %v135
    %v144 = vpack.c.bf16 %v136, %v136
    %v145 = vpack.c.bf16 %v137, %v137
    %v146 = vpack.c.bf16 %v138, %v138
    %v147 = vpack.c.bf16 %v139, %v139
    %v148 = vpack.c.bf16 %v140, %v140
    %v149 = vpack.c.bf16 %v141, %v141
    %v150 = vpack.c.bf16 %v142, %v142
    %v151 = vld [vmem:[#allocation2] sm:$0xf]
    %v152 = vld [vmem:[#allocation2 + $0x4] sm:$0xf]
    %v153 = vld [vmem:[#allocation2 + $0x8] sm:$0xf]
    %v154 = vld [vmem:[#allocation2 + $0xc] sm:$0xf]
    %v155 = vld [vmem:[#allocation2 + $0x10] sm:$0xf]
    %v156 = vld [vmem:[#allocation2 + $0x14] sm:$0xf]
    %v157 = vld [vmem:[#allocation2 + $0x18] sm:$0xf]
    %v158 = vld [vmem:[#allocation2 + $0x1c] sm:$0xf]
    %v159 = vld [vmem:[#allocation2 + $0x20] sm:$0xf]
    %v160 = vld [vmem:[#allocation2 + $0x24] sm:$0xf]
    %v161 = vld [vmem:[#allocation2 + $0x28] sm:$0xf]
    %v162 = vld [vmem:[#allocation2 + $0x2c] sm:$0xf]
    %v163 = vld [vmem:[#allocation2 + $0x30] sm:$0xf]
    %v164 = vld [vmem:[#allocation2 + $0x34] sm:$0xf]
    %v165 = vld [vmem:[#allocation2 + $0x38] sm:$0xf]
    %v166 = vld [vmem:[#allocation2 + $0x3c] sm:$0xf]
    %v167 = vld [vmem:[#allocation2 + $0x40] sm:$0xf]
    %v168 = vld [vmem:[#allocation2 + $0x44] sm:$0xf]
    %v169 = vld [vmem:[#allocation2 + $0x48] sm:$0xf]
    %v170 = vld [vmem:[#allocation2 + $0x4c] sm:$0xf]
    %v171 = vld [vmem:[#allocation2 + $0x50] sm:$0xf]
    %v172 = vld [vmem:[#allocation2 + $0x54] sm:$0xf]
    %v173 = vld [vmem:[#allocation2 + $0x58] sm:$0xf]
    %v174 = vld [vmem:[#allocation2 + $0x5c] sm:$0xf]
    %v175 = vld [vmem:[#allocation2 + $0x60] sm:$0xf]
    %v176 = vld [vmem:[#allocation2 + $0x64] sm:$0xf]
    %v177 = vld [vmem:[#allocation2 + $0x68] sm:$0xf]
    %v178 = vld [vmem:[#allocation2 + $0x6c] sm:$0xf]
    %v179 = vld [vmem:[#allocation2 + $0x70] sm:$0xf]
    %v180 = vld [vmem:[#allocation2 + $0x74] sm:$0xf]
    %v181 = vld [vmem:[#allocation2 + $0x78] sm:$0xf]
    %v182 = vld [vmem:[#allocation2 + $0x7c] sm:$0xf]
    %v183 = vld [vmem:[#allocation2 + $0x80] sm:$0xf]
    %v184 = vld [vmem:[#allocation2 + $0x84] sm:$0xf]
    %v185 = vld [vmem:[#allocation2 + $0x88] sm:$0xf]
    %v186 = vld [vmem:[#allocation2 + $0x8c] sm:$0xf]
    %v187 = vld [vmem:[#allocation2 + $0x90] sm:$0xf]
    %v188 = vld [vmem:[#allocation2 + $0x94] sm:$0xf]
    %v189 = vld [vmem:[#allocation2 + $0x98] sm:$0xf]
    %v190 = vld [vmem:[#allocation2 + $0x9c] sm:$0xf]
    %v191 = vld [vmem:[#allocation2 + $0xa0] sm:$0xf]
    %v192 = vld [vmem:[#allocation2 + $0xa4] sm:$0xf]
    %v193 = vld [vmem:[#allocation2 + $0xa8] sm:$0xf]
    %v194 = vld [vmem:[#allocation2 + $0xac] sm:$0xf]
    %v195 = vld [vmem:[#allocation2 + $0xb0] sm:$0xf]
    %v196 = vld [vmem:[#allocation2 + $0xb4] sm:$0xf]
    %v197 = vld [vmem:[#allocation2 + $0xb8] sm:$0xf]
    %v198 = vld [vmem:[#allocation2 + $0xbc] sm:$0xf]
    %v199 = vld [vmem:[#allocation2 + $0xc0] sm:$0xf]
    %v200 = vld [vmem:[#allocation2 + $0xc4] sm:$0xf]
    %v201 = vld [vmem:[#allocation2 + $0xc8] sm:$0xf]
    %v202 = vld [vmem:[#allocation2 + $0xcc] sm:$0xf]
    %v203 = vld [vmem:[#allocation2 + $0xd0] sm:$0xf]
    %v204 = vld [vmem:[#allocation2 + $0xd4] sm:$0xf]
    %v205 = vld [vmem:[#allocation2 + $0xd8] sm:$0xf]
    %v206 = vld [vmem:[#allocation2 + $0xdc] sm:$0xf]
    %v207 = vld [vmem:[#allocation2 + $0xe0] sm:$0xf]
    %v208 = vld [vmem:[#allocation2 + $0xe4] sm:$0xf]
    %v209 = vld [vmem:[#allocation2 + $0xe8] sm:$0xf]
    %v210 = vld [vmem:[#allocation2 + $0xec] sm:$0xf]
    %v211 = vld [vmem:[#allocation2 + $0xf0] sm:$0xf]
    %v212 = vld [vmem:[#allocation2 + $0xf4] sm:$0xf]
    %v213 = vld [vmem:[#allocation2 + $0xf8] sm:$0xf]
    %v214 = vld [vmem:[#allocation2 + $0xfc] sm:$0xf]
    %v215 = vld [vmem:[#allocation2 + $0x100] sm:$0xf]
    %v216 = vld [vmem:[#allocation2 + $0x104] sm:$0xf]
    %v217 = vld [vmem:[#allocation2 + $0x108] sm:$0xf]
    %v218 = vld [vmem:[#allocation2 + $0x10c] sm:$0xf]
    %v219 = vld [vmem:[#allocation2 + $0x110] sm:$0xf]
    %v220 = vld [vmem:[#allocation2 + $0x114] sm:$0xf]
    %v221 = vld [vmem:[#allocation2 + $0x118] sm:$0xf]
    %v222 = vld [vmem:[#allocation2 + $0x11c] sm:$0xf]
    %v223 = vld [vmem:[#allocation2 + $0x120] sm:$0xf]
    %v224 = vld [vmem:[#allocation2 + $0x124] sm:$0xf]
    %v225 = vld [vmem:[#allocation2 + $0x128] sm:$0xf]
    %v226 = vld [vmem:[#allocation2 + $0x12c] sm:$0xf]
    %v227 = vld [vmem:[#allocation2 + $0x130] sm:$0xf]
    %v228 = vld [vmem:[#allocation2 + $0x134] sm:$0xf]
    %v229 = vld [vmem:[#allocation2 + $0x138] sm:$0xf]
    %v230 = vld [vmem:[#allocation2 + $0x13c] sm:$0xf]
    %v231 = vld [vmem:[#allocation2 + $0x140] sm:$0xf]
    %v232 = vld [vmem:[#allocation2 + $0x144] sm:$0xf]
    %v233 = vld [vmem:[#allocation2 + $0x148] sm:$0xf]
    %v234 = vld [vmem:[#allocation2 + $0x14c] sm:$0xf]
    %v235 = vld [vmem:[#allocation2 + $0x150] sm:$0xf]
    %v236 = vld [vmem:[#allocation2 + $0x154] sm:$0xf]
    %v237 = vld [vmem:[#allocation2 + $0x158] sm:$0xf]
    %v238 = vld [vmem:[#allocation2 + $0x15c] sm:$0xf]
    %v239 = vld [vmem:[#allocation2 + $0x160] sm:$0xf]
    %v240 = vld [vmem:[#allocation2 + $0x164] sm:$0xf]
    %v241 = vld [vmem:[#allocation2 + $0x168] sm:$0xf]
    %v242 = vld [vmem:[#allocation2 + $0x16c] sm:$0xf]
    %v243 = vld [vmem:[#allocation2 + $0x170] sm:$0xf]
    %v244 = vld [vmem:[#allocation2 + $0x174] sm:$0xf]
    %v245 = vld [vmem:[#allocation2 + $0x178] sm:$0xf]
    %v246 = vld [vmem:[#allocation2 + $0x17c] sm:$0xf]
    %v247 = vld [vmem:[#allocation2 + $0x180] sm:$0xf]
    %v248 = vld [vmem:[#allocation2 + $0x184] sm:$0xf]
    %v249 = vld [vmem:[#allocation2 + $0x188] sm:$0xf]
    %v250 = vld [vmem:[#allocation2 + $0x18c] sm:$0xf]
    %v251 = vld [vmem:[#allocation2 + $0x190] sm:$0xf]
    %v252 = vld [vmem:[#allocation2 + $0x194] sm:$0xf]
    %v253 = vld [vmem:[#allocation2 + $0x198] sm:$0xf]
    %v254 = vld [vmem:[#allocation2 + $0x19c] sm:$0xf]
    %v255 = vld [vmem:[#allocation2 + $0x1a0] sm:$0xf]
    %v256 = vld [vmem:[#allocation2 + $0x1a4] sm:$0xf]
    %v257 = vld [vmem:[#allocation2 + $0x1a8] sm:$0xf]
    %v258 = vld [vmem:[#allocation2 + $0x1ac] sm:$0xf]
    %v259 = vld [vmem:[#allocation2 + $0x1b0] sm:$0xf]
    %v260 = vld [vmem:[#allocation2 + $0x1b4] sm:$0xf]
    %v261 = vld [vmem:[#allocation2 + $0x1b8] sm:$0xf]
    %v262 = vld [vmem:[#allocation2 + $0x1bc] sm:$0xf]
    %v263 = vld [vmem:[#allocation2 + $0x1c0] sm:$0xf]
    %v264 = vld [vmem:[#allocation2 + $0x1c4] sm:$0xf]
    %v265 = vld [vmem:[#allocation2 + $0x1c8] sm:$0xf]
    %v266 = vld [vmem:[#allocation2 + $0x1cc] sm:$0xf]
    %v267 = vld [vmem:[#allocation2 + $0x1d0] sm:$0xf]
    %v268 = vld [vmem:[#allocation2 + $0x1d4] sm:$0xf]
    %v269 = vld [vmem:[#allocation2 + $0x1d8] sm:$0xf]
    %v270 = vld [vmem:[#allocation2 + $0x1dc] sm:$0xf]
    %v271 = vld [vmem:[#allocation2 + $0x1e0] sm:$0xf]
    %v272 = vld [vmem:[#allocation2 + $0x1e4] sm:$0xf]
    %v273 = vld [vmem:[#allocation2 + $0x1e8] sm:$0xf]
    %v274 = vld [vmem:[#allocation2 + $0x1ec] sm:$0xf]
    %v275 = vld [vmem:[#allocation2 + $0x1f0] sm:$0xf]
    %v276 = vld [vmem:[#allocation2 + $0x1f4] sm:$0xf]
    %v277 = vld [vmem:[#allocation2 + $0x1f8] sm:$0xf]
    %v278 = vld [vmem:[#allocation2 + $0x1fc] sm:$0xf]
    %v279 = vld [vmem:[%s3] sm:$0x1]
    %v281 = vlaneseq
    %v282 = vshrl.u32 %v281, 7
    %v283 = vsub.s32 0, %v282
    %v284 = vrot.slane %v279, %v283
    %v414 = vunpack.c.l.b16 %v151
    %v415 = vunpack.c.l.b16 %v152
    %v416 = vunpack.c.l.b16 %v153
    %v417 = vunpack.c.l.b16 %v154
    %v418 = vunpack.c.l.b16 %v155
    %v419 = vunpack.c.l.b16 %v156
    %v420 = vunpack.c.l.b16 %v157
    %v421 = vunpack.c.l.b16 %v158
    %v422 = vunpack.c.l.b16 %v159
    %v423 = vunpack.c.l.b16 %v160
    %v424 = vunpack.c.l.b16 %v161
    %v425 = vunpack.c.l.b16 %v162
    %v426 = vunpack.c.l.b16 %v163
    %v427 = vunpack.c.l.b16 %v164
    %v428 = vunpack.c.l.b16 %v165
    %v429 = vunpack.c.l.b16 %v166
    %v430 = vunpack.c.l.b16 %v167
    %v431 = vunpack.c.l.b16 %v168
    %v432 = vunpack.c.l.b16 %v169
    %v433 = vunpack.c.l.b16 %v170
    %v434 = vunpack.c.l.b16 %v171
    %v435 = vunpack.c.l.b16 %v172
    %v436 = vunpack.c.l.b16 %v173
    %v437 = vunpack.c.l.b16 %v174
    %v438 = vunpack.c.l.b16 %v175
    %v439 = vunpack.c.l.b16 %v176
    %v440 = vunpack.c.l.b16 %v177
    %v441 = vunpack.c.l.b16 %v178
    %v442 = vunpack.c.l.b16 %v179
    %v443 = vunpack.c.l.b16 %v180
    %v444 = vunpack.c.l.b16 %v181
    %v445 = vunpack.c.l.b16 %v182
    %v446 = vunpack.c.l.b16 %v183
    %v447 = vunpack.c.l.b16 %v184
    %v448 = vunpack.c.l.b16 %v185
    %v449 = vunpack.c.l.b16 %v186
    %v450 = vunpack.c.l.b16 %v187
    %v451 = vunpack.c.l.b16 %v188
    %v452 = vunpack.c.l.b16 %v189
    %v453 = vunpack.c.l.b16 %v190
    %v454 = vunpack.c.l.b16 %v191
    %v455 = vunpack.c.l.b16 %v192
    %v456 = vunpack.c.l.b16 %v193
    %v457 = vunpack.c.l.b16 %v194
    %v458 = vunpack.c.l.b16 %v195
    %v459 = vunpack.c.l.b16 %v196
    %v460 = vunpack.c.l.b16 %v197
    %v461 = vunpack.c.l.b16 %v198
    %v462 = vunpack.c.l.b16 %v199
    %v463 = vunpack.c.l.b16 %v200
    %v464 = vunpack.c.l.b16 %v201
    %v465 = vunpack.c.l.b16 %v202
    %v466 = vunpack.c.l.b16 %v203
    %v467 = vunpack.c.l.b16 %v204
    %v468 = vunpack.c.l.b16 %v205
    %v469 = vunpack.c.l.b16 %v206
    %v470 = vunpack.c.l.b16 %v207
    %v471 = vunpack.c.l.b16 %v208
    %v472 = vunpack.c.l.b16 %v209
    %v473 = vunpack.c.l.b16 %v210
    %v474 = vunpack.c.l.b16 %v211
    %v475 = vunpack.c.l.b16 %v212
    %v476 = vunpack.c.l.b16 %v213
    %v477 = vunpack.c.l.b16 %v214
    %v478 = vunpack.c.l.b16 %v215
    %v479 = vunpack.c.l.b16 %v216
    %v480 = vunpack.c.l.b16 %v217
    %v481 = vunpack.c.l.b16 %v218
    %v482 = vunpack.c.l.b16 %v219
    %v483 = vunpack.c.l.b16 %v220
    %v484 = vunpack.c.l.b16 %v221
    %v485 = vunpack.c.l.b16 %v222
    %v486 = vunpack.c.l.b16 %v223
    %v487 = vunpack.c.l.b16 %v224
    %v488 = vunpack.c.l.b16 %v225
    %v489 = vunpack.c.l.b16 %v226
    %v490 = vunpack.c.l.b16 %v227
    %v491 = vunpack.c.l.b16 %v228
    %v492 = vunpack.c.l.b16 %v229
    %v493 = vunpack.c.l.b16 %v230
    %v494 = vunpack.c.l.b16 %v231
    %v495 = vunpack.c.l.b16 %v232
    %v496 = vunpack.c.l.b16 %v233
    %v497 = vunpack.c.l.b16 %v234
    %v498 = vunpack.c.l.b16 %v235
    %v499 = vunpack.c.l.b16 %v236
    %v500 = vunpack.c.l.b16 %v237
    %v501 = vunpack.c.l.b16 %v238
    %v502 = vunpack.c.l.b16 %v239
    %v503 = vunpack.c.l.b16 %v240
    %v504 = vunpack.c.l.b16 %v241
    %v505 = vunpack.c.l.b16 %v242
    %v506 = vunpack.c.l.b16 %v243
    %v507 = vunpack.c.l.b16 %v244
    %v508 = vunpack.c.l.b16 %v245
    %v509 = vunpack.c.l.b16 %v246
    %v510 = vunpack.c.l.b16 %v247
    %v511 = vunpack.c.l.b16 %v248
    %v512 = vunpack.c.l.b16 %v249
    %v513 = vunpack.c.l.b16 %v250
    %v514 = vunpack.c.l.b16 %v251
    %v515 = vunpack.c.l.b16 %v252
    %v516 = vunpack.c.l.b16 %v253
    %v517 = vunpack.c.l.b16 %v254
    %v518 = vunpack.c.l.b16 %v255
    %v519 = vunpack.c.l.b16 %v256
    %v520 = vunpack.c.l.b16 %v257
    %v521 = vunpack.c.l.b16 %v258
    %v522 = vunpack.c.l.b16 %v259
    %v523 = vunpack.c.l.b16 %v260
    %v524 = vunpack.c.l.b16 %v261
    %v525 = vunpack.c.l.b16 %v262
    %v526 = vunpack.c.l.b16 %v263
    %v527 = vunpack.c.l.b16 %v264
    %v528 = vunpack.c.l.b16 %v265
    %v529 = vunpack.c.l.b16 %v266
    %v530 = vunpack.c.l.b16 %v267
    %v531 = vunpack.c.l.b16 %v268
    %v532 = vunpack.c.l.b16 %v269
    %v533 = vunpack.c.l.b16 %v270
    %v534 = vunpack.c.l.b16 %v271
    %v535 = vunpack.c.l.b16 %v272
    %v536 = vunpack.c.l.b16 %v273
    %v537 = vunpack.c.l.b16 %v274
    %v538 = vunpack.c.l.b16 %v275
    %v539 = vunpack.c.l.b16 %v276
    %v540 = vunpack.c.l.b16 %v277
    %v541 = vunpack.c.l.b16 %v278
    %v542 = vpack.c.b16 %v415, %v414
    %v543 = vpack.c.b16 %v417, %v416
    %v544 = vpack.c.b16 %v419, %v418
    %v545 = vpack.c.b16 %v421, %v420
    %v546 = vpack.c.b16 %v423, %v422
    %v547 = vpack.c.b16 %v425, %v424
    %v548 = vpack.c.b16 %v427, %v426
    %v549 = vpack.c.b16 %v429, %v428
    %v550 = vpack.c.b16 %v431, %v430
    %v551 = vpack.c.b16 %v433, %v432
    %v552 = vpack.c.b16 %v435, %v434
    %v553 = vpack.c.b16 %v437, %v436
    %v554 = vpack.c.b16 %v439, %v438
    %v555 = vpack.c.b16 %v441, %v440
    %v556 = vpack.c.b16 %v443, %v442
    %v557 = vpack.c.b16 %v445, %v444
    %v558 = vpack.c.b16 %v447, %v446
    %v559 = vpack.c.b16 %v449, %v448
    %v560 = vpack.c.b16 %v451, %v450
    %v561 = vpack.c.b16 %v453, %v452
    %v562 = vpack.c.b16 %v455, %v454
    %v563 = vpack.c.b16 %v457, %v456
    %v564 = vpack.c.b16 %v459, %v458
    %v565 = vpack.c.b16 %v461, %v460
    %v566 = vpack.c.b16 %v463, %v462
    %v567 = vpack.c.b16 %v465, %v464
    %v568 = vpack.c.b16 %v467, %v466
    %v569 = vpack.c.b16 %v469, %v468
    %v570 = vpack.c.b16 %v471, %v470
    %v571 = vpack.c.b16 %v473, %v472
    %v572 = vpack.c.b16 %v475, %v474
    %v573 = vpack.c.b16 %v477, %v476
    %v574 = vpack.c.b16 %v479, %v478
    %v575 = vpack.c.b16 %v481, %v480
    %v576 = vpack.c.b16 %v483, %v482
    %v577 = vpack.c.b16 %v485, %v484
    %v578 = vpack.c.b16 %v487, %v486
    %v579 = vpack.c.b16 %v489, %v488
    %v580 = vpack.c.b16 %v491, %v490
    %v581 = vpack.c.b16 %v493, %v492
    %v582 = vpack.c.b16 %v495, %v494
    %v583 = vpack.c.b16 %v497, %v496
    %v584 = vpack.c.b16 %v499, %v498
    %v585 = vpack.c.b16 %v501, %v500
    %v586 = vpack.c.b16 %v503, %v502
    %v587 = vpack.c.b16 %v505, %v504
    %v588 = vpack.c.b16 %v507, %v506
    %v589 = vpack.c.b16 %v509, %v508
    %v590 = vpack.c.b16 %v511, %v510
    %v591 = vpack.c.b16 %v513, %v512
    %v592 = vpack.c.b16 %v515, %v514
    %v593 = vpack.c.b16 %v517, %v516
    %v594 = vpack.c.b16 %v519, %v518
    %v595 = vpack.c.b16 %v521, %v520
    %v596 = vpack.c.b16 %v523, %v522
    %v597 = vpack.c.b16 %v525, %v524
    %v598 = vpack.c.b16 %v527, %v526
    %v599 = vpack.c.b16 %v529, %v528
    %v600 = vpack.c.b16 %v531, %v530
    %v601 = vpack.c.b16 %v533, %v532
    %v602 = vpack.c.b16 %v535, %v534
    %v603 = vpack.c.b16 %v537, %v536
    %v604 = vpack.c.b16 %v539, %v538
    %v605 = vpack.c.b16 %v541, %v540
    %670 = vmatprep.subr.bf16.mxu0 0
    %671 = vmatpush1.bf16.msra.mxu0 %v542
    %672 = vmatprep.subr.bf16.mxu0 0
    %673 = vmatpush1.bf16.msra.mxu0 %v543
    %674 = vmatprep.subr.bf16.mxu0 0
    %675 = vmatpush1.bf16.msra.mxu0 %v544
    %676 = vmatprep.subr.bf16.mxu0 0
    %677 = vmatpush1.bf16.msra.mxu0 %v545
    %678 = vmatprep.subr.bf16.mxu0 0
    %679 = vmatpush1.bf16.msra.mxu0 %v546
    %680 = vmatprep.subr.bf16.mxu0 0
    %681 = vmatpush1.bf16.msra.mxu0 %v547
    %682 = vmatprep.subr.bf16.mxu0 0
    %683 = vmatpush1.bf16.msra.mxu0 %v548
    %684 = vmatprep.subr.bf16.mxu0 0
    %685 = vmatpush1.bf16.msra.mxu0 %v549
    %686 = vmatprep.subr.bf16.mxu0 0
    %687 = vmatpush1.bf16.msra.mxu0 %v550
    %688 = vmatprep.subr.bf16.mxu0 0
    %689 = vmatpush1.bf16.msra.mxu0 %v551
    %690 = vmatprep.subr.bf16.mxu0 0
    %691 = vmatpush1.bf16.msra.mxu0 %v552
    %692 = vmatprep.subr.bf16.mxu0 0
    %693 = vmatpush1.bf16.msra.mxu0 %v553
    %694 = vmatprep.subr.bf16.mxu0 0
    %695 = vmatpush1.bf16.msra.mxu0 %v554
    %696 = vmatprep.subr.bf16.mxu0 0
    %697 = vmatpush1.bf16.msra.mxu0 %v555
    %698 = vmatprep.subr.bf16.mxu0 0
    %699 = vmatpush1.bf16.msra.mxu0 %v556
    %700 = vmatprep.subr.bf16.mxu0 0
    %701 = vmatpush1.bf16.msra.mxu0 %v557
    %702 = vmatprep.mubr.bf16.mxu0 %v144
    %703 = vmatmul.mubr.bf16.gmra.mrb[0].mxu0 %v143
    %v704 = vpop.f32.mrb[0].mxu0
    %v705 = vadd.f32 %v284, %v704
    %v706 = vpop.f32.mrb[0].mxu0
    %v707 = vpop.f32.mrb[0].mxu0
    %v708 = vpop.f32.mrb[0].mxu0
    %709 = vdwg.mxu0
    %710 = vmatprep.subr.bf16.mxu0 0
    %711 = vmatpush1.bf16.msra.mxu0 %v558
    %712 = vmatprep.subr.bf16.mxu0 0
    %713 = vmatpush1.bf16.msra.mxu0 %v559
    %714 = vmatprep.subr.bf16.mxu0 0
    %715 = vmatpush1.bf16.msra.mxu0 %v560
    %716 = vmatprep.subr.bf16.mxu0 0
    %717 = vmatpush1.bf16.msra.mxu0 %v561
    %718 = vmatprep.subr.bf16.mxu0 0
    %719 = vmatpush1.bf16.msra.mxu0 %v562
    %720 = vmatprep.subr.bf16.mxu0 0
    %721 = vmatpush1.bf16.msra.mxu0 %v563
    %722 = vmatprep.subr.bf16.mxu0 0
    %723 = vmatpush1.bf16.msra.mxu0 %v564
    %724 = vmatprep.subr.bf16.mxu0 0
    %725 = vmatpush1.bf16.msra.mxu0 %v565
    %726 = vmatprep.subr.bf16.mxu0 0
    %727 = vmatpush1.bf16.msra.mxu0 %v566
    %728 = vmatprep.subr.bf16.mxu0 0
    %729 = vmatpush1.bf16.msra.mxu0 %v567
    %730 = vmatprep.subr.bf16.mxu0 0
    %731 = vmatpush1.bf16.msra.mxu0 %v568
    %732 = vmatprep.subr.bf16.mxu0 0
    %733 = vmatpush1.bf16.msra.mxu0 %v569
    %734 = vmatprep.subr.bf16.mxu0 0
    %735 = vmatpush1.bf16.msra.mxu0 %v570
    %736 = vmatprep.subr.bf16.mxu0 0
    %737 = vmatpush1.bf16.msra.mxu0 %v571
    %738 = vmatprep.subr.bf16.mxu0 0
    %739 = vmatpush1.bf16.msra.mxu0 %v572
    %740 = vmatprep.subr.bf16.mxu0 0
    %741 = vmatpush1.bf16.msra.mxu0 %v573
    %742 = vmatprep.mubr.bf16.mxu0 %v146
    %743 = vmatmul.mubr.bf16.gmra.mrb[0].mxu0 %v145
    %v744 = vpop.f32.mrb[0].mxu0
    %v745 = vadd.f32 %v705, %v744
    %v746 = vpop.f32.mrb[0].mxu0
    %v747 = vpop.f32.mrb[0].mxu0
    %v748 = vpop.f32.mrb[0].mxu0
    %749 = vdwg.mxu0
    %750 = vmatprep.subr.bf16.mxu0 0
    %751 = vmatpush1.bf16.msra.mxu0 %v574
    %752 = vmatprep.subr.bf16.mxu0 0
    %753 = vmatpush1.bf16.msra.mxu0 %v575
    %754 = vmatprep.subr.bf16.mxu0 0
    %755 = vmatpush1.bf16.msra.mxu0 %v576
    %756 = vmatprep.subr.bf16.mxu0 0
    %757 = vmatpush1.bf16.msra.mxu0 %v577
    %758 = vmatprep.subr.bf16.mxu0 0
    %759 = vmatpush1.bf16.msra.mxu0 %v578
    %760 = vmatprep.subr.bf16.mxu0 0
    %761 = vmatpush1.bf16.msra.mxu0 %v579
    %762 = vmatprep.subr.bf16.mxu0 0
    %763 = vmatpush1.bf16.msra.mxu0 %v580
    %764 = vmatprep.subr.bf16.mxu0 0
    %765 = vmatpush1.bf16.msra.mxu0 %v581
    %766 = vmatprep.subr.bf16.mxu0 0
    %767 = vmatpush1.bf16.msra.mxu0 %v582
    %768 = vmatprep.subr.bf16.mxu0 0
    %769 = vmatpush1.bf16.msra.mxu0 %v583
    %770 = vmatprep.subr.bf16.mxu0 0
    %771 = vmatpush1.bf16.msra.mxu0 %v584
    %772 = vmatprep.subr.bf16.mxu0 0
    %773 = vmatpush1.bf16.msra.mxu0 %v585
    %774 = vmatprep.subr.bf16.mxu0 0
    %775 = vmatpush1.bf16.msra.mxu0 %v586
    %776 = vmatprep.subr.bf16.mxu0 0
    %777 = vmatpush1.bf16.msra.mxu0 %v587
    %778 = vmatprep.subr.bf16.mxu0 0
    %779 = vmatpush1.bf16.msra.mxu0 %v588
    %780 = vmatprep.subr.bf16.mxu0 0
    %781 = vmatpush1.bf16.msra.mxu0 %v589
    %782 = vmatprep.mubr.bf16.mxu0 %v148
    %783 = vmatmul.mubr.bf16.gmra.mrb[0].mxu0 %v147
    %v784 = vpop.f32.mrb[0].mxu0
    %v785 = vadd.f32 %v745, %v784
    %v786 = vpop.f32.mrb[0].mxu0
    %v787 = vpop.f32.mrb[0].mxu0
    %v788 = vpop.f32.mrb[0].mxu0
    %789 = vdwg.mxu0
    %790 = vmatprep.subr.bf16.mxu0 0
    %791 = vmatpush1.bf16.msra.mxu0 %v590
    %792 = vmatprep.subr.bf16.mxu0 0
    %793 = vmatpush1.bf16.msra.mxu0 %v591
    %794 = vmatprep.subr.bf16.mxu0 0
    %795 = vmatpush1.bf16.msra.mxu0 %v592
    %796 = vmatprep.subr.bf16.mxu0 0
    %797 = vmatpush1.bf16.msra.mxu0 %v593
    %798 = vmatprep.subr.bf16.mxu0 0
    %799 = vmatpush1.bf16.msra.mxu0 %v594
    %800 = vmatprep.subr.bf16.mxu0 0
    %801 = vmatpush1.bf16.msra.mxu0 %v595
    %802 = vmatprep.subr.bf16.mxu0 0
    %803 = vmatpush1.bf16.msra.mxu0 %v596
    %804 = vmatprep.subr.bf16.mxu0 0
    %805 = vmatpush1.bf16.msra.mxu0 %v597
    %806 = vmatprep.subr.bf16.mxu0 0
    %807 = vmatpush1.bf16.msra.mxu0 %v598
    %808 = vmatprep.subr.bf16.mxu0 0
    %809 = vmatpush1.bf16.msra.mxu0 %v599
    %810 = vmatprep.subr.bf16.mxu0 0
    %811 = vmatpush1.bf16.msra.mxu0 %v600
    %812 = vmatprep.subr.bf16.mxu0 0
    %813 = vmatpush1.bf16.msra.mxu0 %v601
    %814 = vmatprep.subr.bf16.mxu0 0
    %815 = vmatpush1.bf16.msra.mxu0 %v602
    %816 = vmatprep.subr.bf16.mxu0 0
    %817 = vmatpush1.bf16.msra.mxu0 %v603
    %818 = vmatprep.subr.bf16.mxu0 0
    %819 = vmatpush1.bf16.msra.mxu0 %v604
    %820 = vmatprep.subr.bf16.mxu0 0
    %821 = vmatpush1.bf16.msra.mxu0 %v605
    %822 = vmatprep.mubr.bf16.mxu0 %v150
    %823 = vmatmul.mubr.bf16.gmra.mrb[0].mxu0 %v149
    %v824 = vpop.f32.mrb[0].mxu0
    %v825 = vadd.f32 %v785, %v824
    %v826 = vpop.f32.mrb[0].mxu0
    %v827 = vpop.f32.mrb[0].mxu0
    %v828 = vpop.f32.mrb[0].mxu0
    %829 = vdwg.mxu0
    %v830 = vmax.f32 %v825, 0.0
    %v831 = vpack.c.bf16 %v830, %v830
    %v832 = vld [vmem:[%s4] sm:$0xf]
    %v833 = vld [vmem:[%s4 + $0x4] sm:$0xf]
    %v834 = vld [vmem:[%s4 + $0x8] sm:$0xf]
    %v835 = vld [vmem:[%s4 + $0xc] sm:$0xf]
    %v836 = vld [vmem:[%s4 + $0x10] sm:$0xf]
    %v837 = vld [vmem:[%s4 + $0x14] sm:$0xf]
    %v838 = vld [vmem:[%s4 + $0x18] sm:$0xf]
    %v839 = vld [vmem:[%s4 + $0x1c] sm:$0xf]
    %v840 = vld [vmem:[%s4 + $0x20] sm:$0xf]
    %v841 = vld [vmem:[%s4 + $0x24] sm:$0xf]
    %v842 = vld [vmem:[%s4 + $0x28] sm:$0xf]
    %v843 = vld [vmem:[%s4 + $0x2c] sm:$0xf]
    %v844 = vld [vmem:[%s4 + $0x30] sm:$0xf]
    %v845 = vld [vmem:[%s4 + $0x34] sm:$0xf]
    %v846 = vld [vmem:[%s4 + $0x38] sm:$0xf]
    %v847 = vld [vmem:[%s4 + $0x3c] sm:$0xf]
    %v848 = vld [vmem:[%s5] sm:$0x1]
    %v850 = vlaneseq
    %v851 = vshrl.u32 %v850, 7
    %v852 = vsub.s32 0, %v851
    %v853 = vrot.slane %v848, %v852
    %v871 = vunpack.c.l.b16 %v832
    %v872 = vunpack.c.l.b16 %v833
    %v873 = vunpack.c.l.b16 %v834
    %v874 = vunpack.c.l.b16 %v835
    %v875 = vunpack.c.l.b16 %v836
    %v876 = vunpack.c.l.b16 %v837
    %v877 = vunpack.c.l.b16 %v838
    %v878 = vunpack.c.l.b16 %v839
    %v879 = vunpack.c.l.b16 %v840
    %v880 = vunpack.c.l.b16 %v841
    %v881 = vunpack.c.l.b16 %v842
    %v882 = vunpack.c.l.b16 %v843
    %v883 = vunpack.c.l.b16 %v844
    %v884 = vunpack.c.l.b16 %v845
    %v885 = vunpack.c.l.b16 %v846
    %v886 = vunpack.c.l.b16 %v847
    %v887 = vpack.c.b16 %v872, %v871
    %v888 = vpack.c.b16 %v874, %v873
    %v889 = vpack.c.b16 %v876, %v875
    %v890 = vpack.c.b16 %v878, %v877
    %v891 = vpack.c.b16 %v880, %v879
    %v892 = vpack.c.b16 %v882, %v881
    %v893 = vpack.c.b16 %v884, %v883
    %v894 = vpack.c.b16 %v886, %v885
    %903 = vmatprep.subr.bf16.mxu0 0
    %904 = vmatpush1.bf16.msra.mxu0 %v887
    %905 = vmatprep.subr.bf16.mxu0 0
    %906 = vmatpush1.bf16.msra.mxu0 %v888
    %907 = vmatprep.subr.bf16.mxu0 0
    %908 = vmatpush1.bf16.msra.mxu0 %v889
    %909 = vmatprep.subr.bf16.mxu0 0
    %910 = vmatpush1.bf16.msra.mxu0 %v890
    %911 = vmatprep.subr.bf16.mxu0 0
    %912 = vmatpush1.bf16.msra.mxu0 %v891
    %913 = vmatprep.subr.bf16.mxu0 0
    %914 = vmatpush1.bf16.msra.mxu0 %v892
    %915 = vmatprep.subr.bf16.mxu0 0
    %916 = vmatpush1.bf16.msra.mxu0 %v893
    %917 = vmatprep.subr.bf16.mxu0 0
    %918 = vmatpush1.bf16.msra.mxu0 %v894
    %919 = vmatprep.subr.bf16.mxu0 0
    %920 = vmatpush1.bf16.msra.mxu0 0
    %921 = vmatprep.subr.bf16.mxu0 0
    %922 = vmatpush1.bf16.msra.mxu0 0
    %923 = vmatprep.subr.bf16.mxu0 0
    %924 = vmatpush1.bf16.msra.mxu0 0
    %925 = vmatprep.subr.bf16.mxu0 0
    %926 = vmatpush1.bf16.msra.mxu0 0
    %927 = vmatprep.subr.bf16.mxu0 0
    %928 = vmatpush1.bf16.msra.mxu0 0
    %929 = vmatprep.subr.bf16.mxu0 0
    %930 = vmatpush1.bf16.msra.mxu0 0
    %931 = vmatprep.subr.bf16.mxu0 0
    %932 = vmatpush1.bf16.msra.mxu0 0
    %933 = vmatprep.subr.bf16.mxu0 0
    %934 = vmatpush1.bf16.msra.mxu0 0
    %935 = vmatprep.mubr.bf16.mxu0 0
    %936 = vmatmul.mubr.bf16.gmra.mrb[0].mxu0 %v831
    %v937 = vpop.f32.mrb[0].mxu0
    %v938 = vadd.f32 %v853, %v937
    %v939 = vpop.f32.mrb[0].mxu0
    %v940 = vpop.f32.mrb[0].mxu0
    %v941 = vpop.f32.mrb[0].mxu0
    %942 = vdwg.mxu0
    %943 = vst [vmem:[#allocation5] sm:$0x3] %v938
    %944 = vst [vmem:[#allocation6 - $0x2] sm:$0xc] %v938
    // Predicated region
    $region30: #{siamese_forward.1} parent=1 // pred_check
      _
    $region31: #{siamese_forward.1} parent=1 // pred_check_branch
      %946 = sbr.rel (0) target = $region33
    $region32: #{siamese_forward.1} parent=1 // pred_region
      %s948 = ssub.s32 32, 32
      %949 = vsyncadd [#allocation4], %s948
      %s951 = sshll.u32 [#allocation5], 4
      %s952 = int_to_ptr.vmem [resolvable:$true] %s951
      %954 = dma.vmem_to_hbm [thread:$0]  %s952, 32, %s6, [#allocation4]
    $region33: #{siamese_forward.1} parent=1 // pred_fallthru
      _
    // Predicated region
    $region34: #{siamese_forward.1} parent=1 // pred_check
      _
    $region35: #{siamese_forward.1} parent=1 // pred_check_branch
      %956 = sbr.rel (0) target = $region37
    $region36: #{siamese_forward.1} parent=1 // pred_region
      %s958 = ssub.s32 32, 32
      %959 = vsyncadd [#allocation7], %s958
      %s961 = sshll.u32 [#allocation6], 4
      %s962 = int_to_ptr.vmem [resolvable:$true] %s961
      %964 = dma.vmem_to_hbm [thread:$0]  %s962, 32, %s7, [#allocation7]
    $region37: #{siamese_forward.1} parent=1 // pred_fallthru
      _
    // Predicated region
    $region38: #{siamese_forward.1} parent=1 // pred_check
      _
    $region39: #{siamese_forward.1} parent=1 // pred_check_branch
      %966 = sbr.rel (0) target = $region41
    $region40: #{siamese_forward.1} parent=1 // pred_region
      %967 = dma.done [#allocation4], 32
    $region41: #{siamese_forward.1} parent=1 // pred_fallthru
      _
    // Predicated region
    $region42: #{siamese_forward.1} parent=1 // pred_check
      _
    $region43: #{siamese_forward.1} parent=1 // pred_check_branch
      %969 = sbr.rel (0) target = $region45
    $region44: #{siamese_forward.1} parent=1 // pred_region
      %970 = dma.done [#allocation7], 32
    $region45: #{siamese_forward.1} parent=1 // pred_fallthru
      _
    %971 = vsyncpa [#allocation3], 1
    %972 = vsyncpa [#allocation4], 1
    %973 = vsyncpa [#allocation7], 1

</llo_original>
